<compile_context>
chip_gen: v6e
topology: v6e:2x2x1
jax: 0.10.0
libtpu: 0.0.40
codegen_flags: <defaults>
</compile_context>

<pallas_src>
import jax
import jax.numpy as jnp
from jax.experimental import pallas as pl
from jax.experimental.pallas import tpu as pltpu

N_NODES = 8          # number of graph nodes (multiple of 8 -> sublane aligned)
N_EDGES = 16         # number of edges in the toy graph (fixed at trace time)
F_IN = 3             # input feature dim   (GCNConv(3, 16))
F_HID = 16           # hidden feature dim
F_OUT = 7            # output classes      (GCNConv(16, 7))

F_IN_PAD = 8         # node features padded to 8 lanes (done once at data prep)
C_PAD = 8            # output classes padded to 8 lanes
LANES = 128          # lane width of the packed parameter slab
SLAB_ROWS = 40       # sublane-aligned slab height

# Row layout of the packed parameter slab ([SLAB_ROWS, LANES] f32):
W1_ROW = 0           # rows  0: 8, lanes 0:16  -> W1 (real block [0:F_IN, 0:F_HID])
W2_ROW = 8           # rows  8:24, lanes 0:8   -> W2 (real block [:,     0:F_OUT]) UNtransposed
B1_ROW = 24          # row  24,    lanes 0:16  -> b1   (sublane 0 / lane 0 of its tile)
B2_ROW = 32          # row  32,    lanes 0:8   -> b2   (sublane 0 / lane 0 of its tile)


def _gcn_kernel(edge_ref, x_ref, p_ref, o_ref):
    """Whole GCN forward in one invocation, fully VMEM resident.

    edge_ref: VMEM [2, E] int32            (row 0 = src, row 1 = dst)
    x_ref   : VMEM [N, F_IN_PAD] f32       (zero padded past F_IN, padded at prep time)
    p_ref   : VMEM [SLAB_ROWS, LANES] f32  packed parameter slab (layout above)
    o_ref   : VMEM [N, C_PAD] f32          log-softmax output (real block [:, :F_OUT])
    """
    n = x_ref.shape[0]
    n_edges = edge_ref.shape[1]

    # ---- vectorized A = I + scatter(dst, src): two iota compares + one MXU matmul ----
    node_ids = jax.lax.broadcasted_iota(jnp.int32, (n, n_edges), 0)     # [N, E]
    src_oh = (node_ids == edge_ref[0:1, :]).astype(jnp.float32)         # [N, E]
    dst_oh = (node_ids == edge_ref[1:2, :]).astype(jnp.float32)         # [N, E]
    # NOTE: if the edge count varies per graph, keep E fixed and mark unused edges
    # with dst = src = N (out of range) so both one-hot columns are all-zero.

    row = jax.lax.broadcasted_iota(jnp.int32, (n, n), 0)
    col = jax.lax.broadcasted_iota(jnp.int32, (n, n), 1)
    eye = (row == col).astype(jnp.float32)

    # adj[d, s] = I[d, s] + #edges(dst=d, src=s); contraction over E runs on the MXU
    # (rhs contracted on dim 1 == trans_b matmul, same native pattern as q @ k^T).
    adj = eye + jax.lax.dot_general(
        dst_oh, src_oh, (((1,), (1,)), ((), ())),
        preferred_element_type=jnp.float32)                             # [N, N]

    # row degree of (A + I) = 1 + #incoming edges = 1 + lane-sum of dst_oh
    deg = 1.0 + jnp.sum(dst_oh, axis=1, keepdims=True)                  # [N, 1]
    dinv = jax.lax.rsqrt(deg)                                           # d^{-1/2}, [N, 1]

    # ---- parameters: static ref slices -> direct narrow VMEM loads ----
    w1 = p_ref[W1_ROW:W1_ROW + F_IN_PAD, 0:F_HID]     # [8, 16]  rows >= F_IN are 0
    w2 = p_ref[W2_ROW:W2_ROW + F_HID, 0:C_PAD]        # [16, 8]  col  >= F_OUT is 0
    b1 = p_ref[B1_ROW:B1_ROW + 1, 0:F_HID]            # [1, 16]
    b2 = p_ref[B2_ROW:B2_ROW + 1, 0:C_PAD]            # [1, 8]

    # ---- layer 1:  relu( dinv * (adj @ (dinv * (X @ W1))) + b1 ) ----
    xw1 = jnp.dot(x_ref[...], w1, preferred_element_type=jnp.float32)   # [N, 16]
    h = dinv * jnp.dot(adj, dinv * xw1, preferred_element_type=jnp.float32) + b1
    h = jnp.maximum(h, 0.0)

    # ---- layer 2:  dinv * (adj @ (dinv * (H @ W2))) + b2  (plain MXU matmul) ----
    hw2 = jnp.dot(h, w2, preferred_element_type=jnp.float32)            # [N, C_PAD]
    z = dinv * jnp.dot(adj, dinv * hw2, preferred_element_type=jnp.float32) + b2

    # ---- log_softmax over the class dim (mask out padded class lanes) ----
    cls = jax.lax.broadcasted_iota(jnp.int32, z.shape, 1)
    z = jnp.where(cls < F_OUT, z, jnp.float32(-1e30))
    m = jnp.max(z, axis=1, keepdims=True)
    e = jnp.exp(z - m)
    s = jnp.sum(e, axis=1, keepdims=True)
    o_ref[...] = (z - m) - jnp.log(s)


@jax.jit
def gcn_forward(x_pad, edge_index, param_slab):
    """x_pad: [N, F_IN_PAD] f32 (pre-padded once at data prep),
    edge_index: [2, E] int32, param_slab: [SLAB_ROWS, LANES] f32.

    Returns the padded [N, C_PAD] log-probabilities (real classes in [:, :F_OUT]);
    slicing is left to the consumer so the hot path is a single pallas_call with
    zero per-call XLA glue ops.
    """
    n = x_pad.shape[0]
    return pl.pallas_call(
        _gcn_kernel,
        out_shape=jax.ShapeDtypeStruct((n, C_PAD), jnp.float32),
        in_specs=[
            pl.BlockSpec(memory_space=pltpu.MemorySpace.VMEM),   # edge_index [2, E]
            pl.BlockSpec(memory_space=pltpu.MemorySpace.VMEM),   # x_pad [N, F_IN_PAD]
            pl.BlockSpec(memory_space=pltpu.MemorySpace.VMEM),   # param slab
        ],
        out_specs=pl.BlockSpec(memory_space=pltpu.MemorySpace.VMEM),
    )(edge_index, x_pad, param_slab)


def init_params(key):
    k1, k2 = jax.random.split(key)
    # glorot-ish deterministic init; biases start at zero (same shapes as GCNConv)
    w1 = jax.random.normal(k1, (F_IN, F_HID), jnp.float32) * (1.0 / jnp.sqrt(F_IN))
    w2 = jax.random.normal(k2, (F_HID, F_OUT), jnp.float32) * (1.0 / jnp.sqrt(F_HID))
    b1 = jnp.zeros((F_HID,), jnp.float32)
    b2 = jnp.zeros((F_OUT,), jnp.float32)
    return {"w1": w1, "b1": b1, "w2": w2, "b2": b2}


def pack_params(params):
    """One-time packing of all parameters into a single pre-padded VMEM slab."""
    slab = jnp.zeros((SLAB_ROWS, LANES), jnp.float32)
    slab = slab.at[W1_ROW:W1_ROW + F_IN, :F_HID].set(params["w1"])   # untransposed
    slab = slab.at[W2_ROW:W2_ROW + F_HID, :F_OUT].set(params["w2"])  # untransposed
    slab = slab.at[B1_ROW, :F_HID].set(params["b1"])
    slab = slab.at[B2_ROW, :F_OUT].set(params["b2"])
    return slab


def prepare_inputs(x, edge_index):
    """One-time data prep (hoisted out of the per-call path, like pack_params)."""
    x_pad = jnp.pad(x, ((0, 0), (0, F_IN_PAD - x.shape[1])))
    return x_pad, edge_index.astype(jnp.int32)


def _reference_forward(x, edge_index, params):
    """Plain-JAX reference of the same math, for a sanity check."""
    n = x.shape[0]
    src, dst = edge_index[0], edge_index[1]
    adj = jnp.zeros((n, n), jnp.float32).at[dst, src].add(1.0) + jnp.eye(n)
    deg = adj.sum(axis=1)
    dinv = jnp.where(deg > 0, jax.lax.rsqrt(deg), 0.0)
    a_hat = dinv[:, None] * adj * dinv[None, :]

    h = a_hat @ (x @ params["w1"]) + params["b1"]
    h = jnp.maximum(h, 0.0)
    z = a_hat @ (h @ params["w2"]) + params["b2"]
    return jax.nn.log_softmax(z, axis=1)


if __name__ == "__main__":
    key = jax.random.PRNGKey(0)
    k_x, k_e, k_p = jax.random.split(key, 3)

    x = jax.random.normal(k_x, (N_NODES, F_IN), jnp.float32)
    edge_index = jax.random.randint(k_e, (2, N_EDGES), 0, N_NODES, jnp.int32)

    params = init_params(k_p)
    param_slab = pack_params(params)              # packed once, reused every call
    x_pad, edges = prepare_inputs(x, edge_index)  # padded / cast once, reused every call

    out_pad = gcn_forward(x_pad, edges, param_slab)
    out_pad = jax.block_until_ready(out_pad)
    out = out_pad[:, :F_OUT]                      # consumer-side slice (outside hot path)

    ref = _reference_forward(x, edge_index, params)
    assert out.shape == (N_NODES, F_OUT)
    assert jnp.allclose(out, ref, atol=1e-4, rtol=1e-4), "mismatch vs reference"

    print("KERNEL_OK")
</pallas_src>

<mosaic_0001>
module attributes {stable_mosaic.version = 11 : i64} {
  func.func @_gcn_kernel(%arg0: memref<2x16xi32, #tpu.memory_space<vmem>>, %arg1: memref<8x8xf32, #tpu.memory_space<vmem>>, %arg2: memref<40x128xf32, #tpu.memory_space<vmem>>, %arg3: memref<8x8xf32, #tpu.memory_space<vmem>>) attributes {dimension_semantics = [], scalar_prefetch = 0 : i64, scratch_operands = 0 : i64, tpu.core_type = #tpu.core_type<tc>} {
    %0 = tpu.iota {dimensions = array<i32: 0>} : vector<8x16xi32>
    %c0 = arith.constant 0 : index
    %c0_0 = arith.constant 0 : index
    %1 = vector.load %arg0[%c0, %c0_0] : memref<2x16xi32, #tpu.memory_space<vmem>>, vector<1x16xi32>
    %2 = vector.broadcast %1 : vector<1x16xi32> to vector<8x16xi32>
    %3 = arith.cmpi eq, %0, %2 : vector<8x16xi32>
    %4 = arith.extui %3 : vector<8x16xi1> to vector<8x16xi32>
    %5 = arith.sitofp %4 : vector<8x16xi32> to vector<8x16xf32>
    %c1 = arith.constant 1 : index
    %c0_1 = arith.constant 0 : index
    %6 = vector.load %arg0[%c1, %c0_1] : memref<2x16xi32, #tpu.memory_space<vmem>>, vector<1x16xi32>
    %7 = vector.broadcast %6 : vector<1x16xi32> to vector<8x16xi32>
    %8 = arith.cmpi eq, %0, %7 : vector<8x16xi32>
    %9 = arith.extui %8 : vector<8x16xi1> to vector<8x16xi32>
    %10 = arith.sitofp %9 : vector<8x16xi32> to vector<8x16xf32>
    %11 = tpu.iota {dimensions = array<i32: 0>} : vector<8x8xi32>
    %12 = tpu.iota {dimensions = array<i32: 1>} : vector<8x8xi32>
    %13 = arith.cmpi eq, %11, %12 : vector<8x8xi32>
    %14 = arith.extui %13 : vector<8x8xi1> to vector<8x8xi32>
    %15 = arith.sitofp %14 : vector<8x8xi32> to vector<8x8xf32>
    %cst = arith.constant dense<0.000000e+00> : vector<8x8xf32>
    %16 = tpu.matmul %10, %5, %cst {dimension_numbers = #tpu.dot_dimension_numbers<[1], [1], [0], [0], [0, 0, 1, 0], [], []>} : vector<8x16xf32>, vector<8x16xf32>, vector<8x8xf32> -> vector<8x8xf32>
    %17 = arith.addf %15, %16 : vector<8x8xf32>
    %cst_2 = arith.constant dense<0.000000e+00> : vector<8xf32>
    %18 = vector.multi_reduction <add>, %10, %cst_2 [1] : vector<8x16xf32> to vector<8xf32>
    %19 = vector.shape_cast %18 : vector<8xf32> to vector<8x1xf32>
    %cst_3 = arith.constant 1.000000e+00 : f32
    %20 = vector.broadcast %cst_3 : f32 to vector<8x1xf32>
    %21 = arith.addf %20, %19 : vector<8x1xf32>
    %22 = math.rsqrt %21 : vector<8x1xf32>
    %c0_4 = arith.constant 0 : index
    %c0_5 = arith.constant 0 : index
    %23 = vector.load %arg2[%c0_4, %c0_5] : memref<40x128xf32, #tpu.memory_space<vmem>>, vector<8x16xf32>
    %c8 = arith.constant 8 : index
    %c0_6 = arith.constant 0 : index
    %24 = vector.load %arg2[%c8, %c0_6] : memref<40x128xf32, #tpu.memory_space<vmem>>, vector<16x8xf32>
    %c24 = arith.constant 24 : index
    %c0_7 = arith.constant 0 : index
    %25 = vector.load %arg2[%c24, %c0_7] : memref<40x128xf32, #tpu.memory_space<vmem>>, vector<1x16xf32>
    %c32 = arith.constant 32 : index
    %c0_8 = arith.constant 0 : index
    %26 = vector.load %arg2[%c32, %c0_8] : memref<40x128xf32, #tpu.memory_space<vmem>>, vector<1x8xf32>
    %c0_9 = arith.constant 0 : index
    %c0_10 = arith.constant 0 : index
    %27 = vector.load %arg1[%c0_9, %c0_10] : memref<8x8xf32, #tpu.memory_space<vmem>>, vector<8x8xf32>
    %cst_11 = arith.constant dense<0.000000e+00> : vector<8x16xf32>
    %28 = tpu.matmul %27, %23, %cst_11 {dimension_numbers = #tpu.dot_dimension_numbers<[1], [0], [0], [1], [0, 0, 1, 1], [], []>} : vector<8x8xf32>, vector<8x16xf32>, vector<8x16xf32> -> vector<8x16xf32>
    %29 = vector.broadcast %22 : vector<8x1xf32> to vector<8x16xf32>
    %30 = arith.mulf %29, %28 : vector<8x16xf32>
    %cst_12 = arith.constant dense<0.000000e+00> : vector<8x16xf32>
    %31 = tpu.matmul %17, %30, %cst_12 {dimension_numbers = #tpu.dot_dimension_numbers<[1], [0], [0], [1], [0, 0, 1, 1], [], []>} : vector<8x8xf32>, vector<8x16xf32>, vector<8x16xf32> -> vector<8x16xf32>
    %32 = vector.broadcast %22 : vector<8x1xf32> to vector<8x16xf32>
    %33 = arith.mulf %32, %31 : vector<8x16xf32>
    %34 = vector.broadcast %25 : vector<1x16xf32> to vector<8x16xf32>
    %35 = arith.addf %33, %34 : vector<8x16xf32>
    %cst_13 = arith.constant 0.000000e+00 : f32
    %36 = vector.broadcast %cst_13 : f32 to vector<8x16xf32>
    %37 = arith.maximumf %35, %36 : vector<8x16xf32>
    %cst_14 = arith.constant dense<0.000000e+00> : vector<8x8xf32>
    %38 = tpu.matmul %37, %24, %cst_14 {dimension_numbers = #tpu.dot_dimension_numbers<[1], [0], [0], [1], [0, 0, 1, 1], [], []>} : vector<8x16xf32>, vector<16x8xf32>, vector<8x8xf32> -> vector<8x8xf32>
    %39 = vector.broadcast %22 : vector<8x1xf32> to vector<8x8xf32>
    %40 = arith.mulf %39, %38 : vector<8x8xf32>
    %cst_15 = arith.constant dense<0.000000e+00> : vector<8x8xf32>
    %41 = tpu.matmul %17, %40, %cst_15 {dimension_numbers = #tpu.dot_dimension_numbers<[1], [0], [0], [1], [0, 0, 1, 1], [], []>} : vector<8x8xf32>, vector<8x8xf32>, vector<8x8xf32> -> vector<8x8xf32>
    %42 = vector.broadcast %22 : vector<8x1xf32> to vector<8x8xf32>
    %43 = arith.mulf %42, %41 : vector<8x8xf32>
    %44 = vector.broadcast %26 : vector<1x8xf32> to vector<8x8xf32>
    %45 = arith.addf %43, %44 : vector<8x8xf32>
    %46 = tpu.iota {dimensions = array<i32: 1>} : vector<8x8xi32>
    %c7_i32 = arith.constant 7 : i32
    %47 = vector.broadcast %c7_i32 : i32 to vector<8x8xi32>
    %48 = arith.cmpi slt, %46, %47 : vector<8x8xi32>
    %cst_16 = arith.constant -1.000000e+30 : f32
    %49 = vector.broadcast %cst_16 : f32 to vector<8x8xf32>
    %50 = arith.select %48, %45, %49 : vector<8x8xi1>, vector<8x8xf32>
    %cst_17 = arith.constant dense<0xFF800000> : vector<8xf32>
    %51 = vector.multi_reduction <maximumf>, %50, %cst_17 [1] : vector<8x8xf32> to vector<8xf32>
    %52 = vector.shape_cast %51 : vector<8xf32> to vector<8x1xf32>
    %53 = vector.broadcast %52 : vector<8x1xf32> to vector<8x8xf32>
    %54 = arith.subf %50, %53 : vector<8x8xf32>
    %55 = math.exp %54 : vector<8x8xf32>
    %cst_18 = arith.constant dense<0.000000e+00> : vector<8xf32>
    %56 = vector.multi_reduction <add>, %55, %cst_18 [1] : vector<8x8xf32> to vector<8xf32>
    %57 = vector.shape_cast %56 : vector<8xf32> to vector<8x1xf32>
    %58 = vector.broadcast %52 : vector<8x1xf32> to vector<8x8xf32>
    %59 = arith.subf %50, %58 : vector<8x8xf32>
    %60 = math.log %57 : vector<8x1xf32>
    %61 = vector.broadcast %60 : vector<8x1xf32> to vector<8x8xf32>
    %62 = arith.subf %59, %61 : vector<8x8xf32>
    %c0_19 = arith.constant 0 : index
    %c0_20 = arith.constant 0 : index
    %63 = vector.load %arg3[%c0_19, %c0_20] : memref<8x8xf32, #tpu.memory_space<vmem>>, vector<8x8xf32>
    tpu.vector_store %arg3[%c0_19, %c0_20], %62 {strides = array<i32>} : memref<8x8xf32, #tpu.memory_space<vmem>>, vector<8x8xf32>,
    return
  }
}

</mosaic_0001>

<llo_original>
// kernel: gcn_forward.1
$region0: #{gcn_forward.1}
  #allocation0 [shape = 'u32[]', space=smem, size = 0x4, offset = 0x4, fixed_abs, tag = 'smem constant byte address 0x4 - core index']
  #allocation1 [shape = 'u32[144,128]{1,0:T(1,128)}', space=vmem, size = 0x12000, scoped, tag = 'internal scratch']
  %s0 = inlined_call_operand.hbm [shape: s32[2,16], index: 0, kind: input, shape index: {}]
  %s1 = inlined_call_operand.hbm [shape: f32[8,8], index: 1, kind: input, shape index: {}]
  %s2 = inlined_call_operand.hbm [shape: f32[40,128], index: 2, kind: input, shape index: {}]
  %s3 = inlined_call_operand.hbm [shape: f32[8,8], index: 3, kind: output, shape index: {}]
  %s4 = sld [smem:[#allocation0]]
  $region34: #{gcn_forward.1} parent=0
    _
  %s6 = ssub.s32 1, %s4
  %s7 = scalar_select 0, %s6, %s4
  $region1: #{gcn_forward.1} parent=0
    #allocation2 [shape = 'u8[1024]{0}', space=vmem, size = 0x400, scoped, tag = 'input window, operand 0, single buffered']
    #allocation3 [shape = 's32[1]{0}', space=sflag, size = 0x4, scoped, tag = 'scoped memory for gcn_forward.1']
    #allocation4 [shape = 's32[1]{0}', space=sflag, size = 0x4, scoped, tag = 'scoped memory for gcn_forward.1']
    #allocation5 [shape = 'u8[4096]{0}', space=vmem, size = 0x1000, scoped, tag = 'input window, operand 1, single buffered']
    #allocation6 [shape = 's32[1]{0}', space=sflag, size = 0x4, scoped, tag = 'scoped memory for gcn_forward.1']
    #allocation7 [shape = 'u8[20480]{0}', space=vmem, size = 0x5000, scoped, tag = 'input window, operand 2, single buffered']
    #allocation8 [shape = 'u8[4096]{0}', space=vmem, size = 0x1000, scoped, tag = 'output window, operand 0, single buffered']
    %8 = vsyncpa [#allocation3], 0
    %9 = vsyncpa [#allocation6], 0
    %10 = vsyncpa [#allocation4], 0
    // Predicated region
    $region2: #{gcn_forward.1} parent=1 // pred_check
      _
    $region3: #{gcn_forward.1} parent=1 // pred_check_branch
      %12 = sbr.rel (0) target = $region5
    $region4: #{gcn_forward.1} parent=1 // pred_region
      %s14 = ssub.s32 32, 32
      %15 = vsyncadd [#allocation3], %s14
      %s17 = sshll.u32 [#allocation2], 4
      %s18 = int_to_ptr.vmem [resolvable:$true] %s17
      %20 = dma.hbm_to_vmem [thread:$0]  %s0, 32, %s18, [#allocation3]
    $region5: #{gcn_forward.1} parent=1 // pred_fallthru
      _
    // Predicated region
    $region6: #{gcn_forward.1} parent=1 // pred_check
      _
    $region7: #{gcn_forward.1} parent=1 // pred_check_branch
      %22 = sbr.rel (0) target = $region9
    $region8: #{gcn_forward.1} parent=1 // pred_region
      %s24 = ssub.s32 128, 128
      %25 = vsyncadd [#allocation6], %s24
      %s27 = sshll.u32 [#allocation5], 4
      %s28 = int_to_ptr.vmem [resolvable:$true] %s27
      %30 = dma.hbm_to_vmem [thread:$0]  %s1, 128, %s28, [#allocation6]
    $region9: #{gcn_forward.1} parent=1 // pred_fallthru
      _
    // Predicated region
    $region10: #{gcn_forward.1} parent=1 // pred_check
      _
    $region11: #{gcn_forward.1} parent=1 // pred_check_branch
      %32 = sbr.rel (0) target = $region13
    $region12: #{gcn_forward.1} parent=1 // pred_region
      %s34 = ssub.s32 640, 640
      %35 = vsyncadd [#allocation6], %s34
      %s36 = sshll.u32 [#allocation7], 4
      %s37 = int_to_ptr.vmem [resolvable:$true] %s36
      %42 = dma.hbm_to_vmem [thread:$0]  %s2, 640, %s37, [#allocation6], 128, 128, 8
    $region13: #{gcn_forward.1} parent=1 // pred_fallthru
      _
    // Predicated region
    $region14: #{gcn_forward.1} parent=1 // pred_check
      _
    $region15: #{gcn_forward.1} parent=1 // pred_check_branch
      %44 = sbr.rel (0) target = $region17
    $region16: #{gcn_forward.1} parent=1 // pred_region
      %45 = dma.done [#allocation3], 32
    $region17: #{gcn_forward.1} parent=1 // pred_fallthru
      _
    // Predicated region
    $region18: #{gcn_forward.1} parent=1 // pred_check
      _
    $region19: #{gcn_forward.1} parent=1 // pred_check_branch
      %47 = sbr.rel (0) target = $region21
    $region20: #{gcn_forward.1} parent=1 // pred_region
      %48 = dma.done [#allocation6], 128
    $region21: #{gcn_forward.1} parent=1 // pred_fallthru
      _
    // Predicated region
    $region22: #{gcn_forward.1} parent=1 // pred_check
      _
    $region23: #{gcn_forward.1} parent=1 // pred_check_branch
      %50 = sbr.rel (0) target = $region25
    $region24: #{gcn_forward.1} parent=1 // pred_region
      %51 = dma.done [#allocation6], 640
    $region25: #{gcn_forward.1} parent=1 // pred_fallthru
      _
    %v52 = vlaneseq
    %v53 = vshrl.u32 %v52, 7
    %v54 = vld [vmem:[#allocation2] sm:$0x1]
    %v55 = vlaneseq
    %v56 = vshrl.u32 %v55, 7
    %v57 = vsub.s32 0, %v56
    %v58 = vrot.slane %v54, %v57
    %vm59 = vcmp.eq.s32.totalorder %v53, %v58
    %v60 = vsel %vm59, 1, 0
    %v61 = vcvt.s32.f32 %v60
    %v62 = vld [vmem:[#allocation2 + $0x1] sm:$0x1]
    %v63 = vlaneseq
    %v64 = vshrl.u32 %v63, 7
    %v65 = vsub.s32 0, %v64
    %v66 = vrot.slane %v62, %v65
    %vm67 = vcmp.eq.s32.totalorder %v53, %v66
    %v68 = vsel %vm67, 1, 0
    %v69 = vcvt.s32.f32 %v68
    %v70 = vlaneseq
    %v71 = vand.u32 %v70, 127
    %vm72 = vcmp.eq.s32.totalorder %v53, %v71
    %v73 = vsel %vm72, 1, 0
    %v74 = vcvt.s32.f32 %v73
    %vm75 = vcmask 130048
    %v77 = vsel %vm75, %v69, 0
    %v80 = vsel %vm75, %v61, 0
    %82 = vmatprep.subr.mxu0 0.0
    %83 = vmatpush1.xpose.msra.mxu0 0.0
    %84 = vmatprep.subr.mxu0 0.0
    %85 = vmatpush1.xpose.msra.mxu0 0.0
    %86 = vmatprep.subr.mxu0 0.0
    %87 = vmatpush1.xpose.msra.mxu0 0.0
    %88 = vmatprep.subr.mxu0 0.0
    %89 = vmatpush1.xpose.msra.mxu0 0.0
    %90 = vmatprep.subr.mxu0 0.0
    %91 = vmatpush1.xpose.msra.mxu0 0.0
    %92 = vmatprep.subr.mxu0 0.0
    %93 = vmatpush1.xpose.msra.mxu0 0.0
    %94 = vmatprep.subr.mxu0 0.0
    %95 = vmatpush1.xpose.msra.mxu0 0.0
    %96 = vmatprep.subr.mxu0 0.0
    %97 = vmatpush1.xpose.msra.mxu0 0.0
    %98 = vmatprep.subr.mxu0 0.0
    %99 = vmatpush1.xpose.msra.mxu0 0.0
    %100 = vmatprep.subr.mxu0 0.0
    %101 = vmatpush1.xpose.msra.mxu0 0.0
    %102 = vmatprep.subr.mxu0 0.0
    %103 = vmatpush1.xpose.msra.mxu0 0.0
    %104 = vmatprep.subr.mxu0 0.0
    %105 = vmatpush1.xpose.msra.mxu0 0.0
    %106 = vmatprep.subr.mxu0 0.0
    %107 = vmatpush1.xpose.msra.mxu0 0.0
    %108 = vmatprep.subr.mxu0 0.0
    %109 = vmatpush1.xpose.msra.mxu0 0.0
    %110 = vmatprep.subr.mxu0 0.0
    %111 = vmatpush1.xpose.msra.mxu0 0.0
    %112 = vmatprep.subr.mxu0 0.0
    %113 = vmatpush1.xpose.msra.mxu0 %v80
    %114 = vmatprep.subr.mxu0 0.0
    %115 = vmatpush2.xpose.msra.mxu0 0.0
    %116 = vmatprep.subr.mxu0 0.0
    %117 = vmatpush2.xpose.msra.mxu0 0.0
    %118 = vmatprep.subr.mxu0 0.0
    %119 = vmatpush2.xpose.msra.mxu0 0.0
    %120 = vmatprep.subr.mxu0 0.0
    %121 = vmatpush2.xpose.msra.mxu0 0.0
    %122 = vmatprep.subr.mxu0 0.0
    %123 = vmatpush2.xpose.msra.mxu0 0.0
    %124 = vmatprep.subr.mxu0 0.0
    %125 = vmatpush2.xpose.msra.mxu0 0.0
    %126 = vmatprep.subr.mxu0 0.0
    %127 = vmatpush2.xpose.msra.mxu0 0.0
    %128 = vmatprep.subr.mxu0 0.0
    %129 = vmatpush2.xpose.msra.mxu0 0.0
    %130 = vmatprep.subr.mxu0 0.0
    %131 = vmatpush2.xpose.msra.mxu0 0.0
    %132 = vmatprep.subr.mxu0 0.0
    %133 = vmatpush2.xpose.msra.mxu0 0.0
    %134 = vmatprep.subr.mxu0 0.0
    %135 = vmatpush2.xpose.msra.mxu0 0.0
    %136 = vmatprep.subr.mxu0 0.0
    %137 = vmatpush2.xpose.msra.mxu0 0.0
    %138 = vmatprep.subr.mxu0 0.0
    %139 = vmatpush2.xpose.msra.mxu0 0.0
    %140 = vmatprep.subr.mxu0 0.0
    %141 = vmatpush2.xpose.msra.mxu0 0.0
    %142 = vmatprep.subr.mxu0 0.0
    %143 = vmatpush2.xpose.msra.mxu0 0.0
    %144 = vmatprep.subr.mxu0 0.0
    %145 = vmatpush2.xpose.msra.mxu0 0.0
    %146 = vmatprep.mubr.f32.mxu0 0.0
    %147 = vmatmul.mubr.f32.gmra.mxu0 %v77
    %v148 = vpop.f32.mrf.mxu0
    %v149 = vadd.f32 0.0, %v148
    %v150 = vpop.f32.mrf.mxu0
    %151 = vdwg.mxu0
    %v152 = vadd.f32 %v74, %v149
    %v153 = vsel %vm75, %v69, 0.0
    %154 = vadd.xlane.f32.xlu0 %v153
    %v155 = vpop.xlane.xlu0 %154
    %v156 = vadd.f32 %v155, 1.0
    %v157 = vrsqrt.pop %v156
    %v158 = vld [vmem:[#allocation7] sm:$0xff]
    %v159 = vld [vmem:[#allocation7 + $0x8] sm:$0xff]
    %v160 = vld [vmem:[#allocation7 + $0x10] sm:$0xff]
    %v161 = vld [vmem:[#allocation7 + $0x18] sm:$0x1]
    %v162 = vld [vmem:[#allocation7 + $0x20] sm:$0x1]
    %v163 = vld [vmem:[#allocation5] sm:$0xff]
    %vm164 = vcmask 64512
    %v166 = vsel %vm164, %v163, 0
    %168 = vmatprep.subr.mxu0 0.0
    %169 = vmatpush1.msra.mxu0 0.0
    %170 = vmatprep.subr.mxu0 0.0
    %171 = vmatpush1.msra.mxu0 0.0
    %172 = vmatprep.subr.mxu0 0.0
    %173 = vmatpush1.msra.mxu0 0.0
    %174 = vmatprep.subr.mxu0 0.0
    %175 = vmatpush1.msra.mxu0 0.0
    %176 = vmatprep.subr.mxu0 0.0
    %177 = vmatpush1.msra.mxu0 0.0
    %178 = vmatprep.subr.mxu0 0.0
    %179 = vmatpush1.msra.mxu0 0.0
    %180 = vmatprep.subr.mxu0 0.0
    %181 = vmatpush1.msra.mxu0 0.0
    %182 = vmatprep.subr.mxu0 0.0
    %183 = vmatpush1.msra.mxu0 0.0
    %184 = vmatprep.subr.mxu0 0.0
    %185 = vmatpush1.msra.mxu0 0.0
    %186 = vmatprep.subr.mxu0 0.0
    %187 = vmatpush1.msra.mxu0 0.0
    %188 = vmatprep.subr.mxu0 0.0
    %189 = vmatpush1.msra.mxu0 0.0
    %190 = vmatprep.subr.mxu0 0.0
    %191 = vmatpush1.msra.mxu0 0.0
    %192 = vmatprep.subr.mxu0 0.0
    %193 = vmatpush1.msra.mxu0 0.0
    %194 = vmatprep.subr.mxu0 0.0
    %195 = vmatpush1.msra.mxu0 0.0
    %196 = vmatprep.subr.mxu0 0.0
    %197 = vmatpush1.msra.mxu0 0.0
    %198 = vmatprep.subr.mxu0 0.0
    %199 = vmatpush1.msra.mxu0 %v158
    %200 = vmatprep.subr.mxu0 0.0
    %201 = vmatpush2.msra.mxu0 0.0
    %202 = vmatprep.subr.mxu0 0.0
    %203 = vmatpush2.msra.mxu0 0.0
    %204 = vmatprep.subr.mxu0 0.0
    %205 = vmatpush2.msra.mxu0 0.0
    %206 = vmatprep.subr.mxu0 0.0
    %207 = vmatpush2.msra.mxu0 0.0
    %208 = vmatprep.subr.mxu0 0.0
    %209 = vmatpush2.msra.mxu0 0.0
    %210 = vmatprep.subr.mxu0 0.0
    %211 = vmatpush2.msra.mxu0 0.0
    %212 = vmatprep.subr.mxu0 0.0
    %213 = vmatpush2.msra.mxu0 0.0
    %214 = vmatprep.subr.mxu0 0.0
    %215 = vmatpush2.msra.mxu0 0.0
    %216 = vmatprep.subr.mxu0 0.0
    %217 = vmatpush2.msra.mxu0 0.0
    %218 = vmatprep.subr.mxu0 0.0
    %219 = vmatpush2.msra.mxu0 0.0
    %220 = vmatprep.subr.mxu0 0.0
    %221 = vmatpush2.msra.mxu0 0.0
    %222 = vmatprep.subr.mxu0 0.0
    %223 = vmatpush2.msra.mxu0 0.0
    %224 = vmatprep.subr.mxu0 0.0
    %225 = vmatpush2.msra.mxu0 0.0
    %226 = vmatprep.subr.mxu0 0.0
    %227 = vmatpush2.msra.mxu0 0.0
    %228 = vmatprep.subr.mxu0 0.0
    %229 = vmatpush2.msra.mxu0 0.0
    %230 = vmatprep.subr.mxu0 0.0
    %231 = vmatpush2.msra.mxu0 0.0
    %232 = vmatprep.mubr.f32.mxu0 0.0
    %233 = vmatmul.mubr.f32.gmra.mxu0 %v166
    %v234 = vpop.f32.mrf.mxu0
    %v235 = vadd.f32 0.0, %v234
    %v236 = vpop.f32.mrf.mxu0
    %237 = vdwg.mxu0
    %v238 = vmul.f32 %v157, %v235
    %v240 = vsel %vm164, %v152, 0
    %242 = vmatprep.subr.mxu0 0.0
    %243 = vmatpush1.msra.mxu0 0.0
    %244 = vmatprep.subr.mxu0 0.0
    %245 = vmatpush1.msra.mxu0 0.0
    %246 = vmatprep.subr.mxu0 0.0
    %247 = vmatpush1.msra.mxu0 0.0
    %248 = vmatprep.subr.mxu0 0.0
    %249 = vmatpush1.msra.mxu0 0.0
    %250 = vmatprep.subr.mxu0 0.0
    %251 = vmatpush1.msra.mxu0 0.0
    %252 = vmatprep.subr.mxu0 0.0
    %253 = vmatpush1.msra.mxu0 0.0
    %254 = vmatprep.subr.mxu0 0.0
    %255 = vmatpush1.msra.mxu0 0.0
    %256 = vmatprep.subr.mxu0 0.0
    %257 = vmatpush1.msra.mxu0 0.0
    %258 = vmatprep.subr.mxu0 0.0
    %259 = vmatpush1.msra.mxu0 0.0
    %260 = vmatprep.subr.mxu0 0.0
    %261 = vmatpush1.msra.mxu0 0.0
    %262 = vmatprep.subr.mxu0 0.0
    %263 = vmatpush1.msra.mxu0 0.0
    %264 = vmatprep.subr.mxu0 0.0
    %265 = vmatpush1.msra.mxu0 0.0
    %266 = vmatprep.subr.mxu0 0.0
    %267 = vmatpush1.msra.mxu0 0.0
    %268 = vmatprep.subr.mxu0 0.0
    %269 = vmatpush1.msra.mxu0 0.0
    %270 = vmatprep.subr.mxu0 0.0
    %271 = vmatpush1.msra.mxu0 0.0
    %272 = vmatprep.subr.mxu0 0.0
    %273 = vmatpush1.msra.mxu0 %v238
    %274 = vmatprep.subr.mxu0 0.0
    %275 = vmatpush2.msra.mxu0 0.0
    %276 = vmatprep.subr.mxu0 0.0
    %277 = vmatpush2.msra.mxu0 0.0
    %278 = vmatprep.subr.mxu0 0.0
    %279 = vmatpush2.msra.mxu0 0.0
    %280 = vmatprep.subr.mxu0 0.0
    %281 = vmatpush2.msra.mxu0 0.0
    %282 = vmatprep.subr.mxu0 0.0
    %283 = vmatpush2.msra.mxu0 0.0
    %284 = vmatprep.subr.mxu0 0.0
    %285 = vmatpush2.msra.mxu0 0.0
    %286 = vmatprep.subr.mxu0 0.0
    %287 = vmatpush2.msra.mxu0 0.0
    %288 = vmatprep.subr.mxu0 0.0
    %289 = vmatpush2.msra.mxu0 0.0
    %290 = vmatprep.subr.mxu0 0.0
    %291 = vmatpush2.msra.mxu0 0.0
    %292 = vmatprep.subr.mxu0 0.0
    %293 = vmatpush2.msra.mxu0 0.0
    %294 = vmatprep.subr.mxu0 0.0
    %295 = vmatpush2.msra.mxu0 0.0
    %296 = vmatprep.subr.mxu0 0.0
    %297 = vmatpush2.msra.mxu0 0.0
    %298 = vmatprep.subr.mxu0 0.0
    %299 = vmatpush2.msra.mxu0 0.0
    %300 = vmatprep.subr.mxu0 0.0
    %301 = vmatpush2.msra.mxu0 0.0
    %302 = vmatprep.subr.mxu0 0.0
    %303 = vmatpush2.msra.mxu0 0.0
    %304 = vmatprep.subr.mxu0 0.0
    %305 = vmatpush2.msra.mxu0 0.0
    %306 = vmatprep.mubr.f32.mxu0 0.0
    %307 = vmatmul.mubr.f32.gmra.mxu0 %v240
    %v308 = vpop.f32.mrf.mxu0
    %v309 = vadd.f32 0.0, %v308
    %v310 = vpop.f32.mrf.mxu0
    %311 = vdwg.mxu0
    %v312 = vmul.f32 %v157, %v309
    %v313 = vlaneseq
    %v314 = vshrl.u32 %v313, 7
    %v315 = vsub.s32 0, %v314
    %v316 = vrot.slane %v161, %v315
    %v317 = vadd.f32 %v312, %v316
    %v318 = vmax.f32 %v317, 0.0
    %v320 = vsel %vm75, %v318, 0
    %322 = vmatprep.subr.mxu0 0.0
    %323 = vmatpush1.msra.mxu0 0.0
    %324 = vmatprep.subr.mxu0 0.0
    %325 = vmatpush1.msra.mxu0 0.0
    %326 = vmatprep.subr.mxu0 0.0
    %327 = vmatpush1.msra.mxu0 0.0
    %328 = vmatprep.subr.mxu0 0.0
    %329 = vmatpush1.msra.mxu0 0.0
    %330 = vmatprep.subr.mxu0 0.0
    %331 = vmatpush1.msra.mxu0 0.0
    %332 = vmatprep.subr.mxu0 0.0
    %333 = vmatpush1.msra.mxu0 0.0
    %334 = vmatprep.subr.mxu0 0.0
    %335 = vmatpush1.msra.mxu0 0.0
    %336 = vmatprep.subr.mxu0 0.0
    %337 = vmatpush1.msra.mxu0 0.0
    %338 = vmatprep.subr.mxu0 0.0
    %339 = vmatpush1.msra.mxu0 0.0
    %340 = vmatprep.subr.mxu0 0.0
    %341 = vmatpush1.msra.mxu0 0.0
    %342 = vmatprep.subr.mxu0 0.0
    %343 = vmatpush1.msra.mxu0 0.0
    %344 = vmatprep.subr.mxu0 0.0
    %345 = vmatpush1.msra.mxu0 0.0
    %346 = vmatprep.subr.mxu0 0.0
    %347 = vmatpush1.msra.mxu0 0.0
    %348 = vmatprep.subr.mxu0 0.0
    %349 = vmatpush1.msra.mxu0 0.0
    %350 = vmatprep.subr.mxu0 0.0
    %351 = vmatpush1.msra.mxu0 %v160
    %352 = vmatprep.subr.mxu0 0.0
    %353 = vmatpush1.msra.mxu0 %v159
    %354 = vmatprep.subr.mxu0 0.0
    %355 = vmatpush2.msra.mxu0 0.0
    %356 = vmatprep.subr.mxu0 0.0
    %357 = vmatpush2.msra.mxu0 0.0
    %358 = vmatprep.subr.mxu0 0.0
    %359 = vmatpush2.msra.mxu0 0.0
    %360 = vmatprep.subr.mxu0 0.0
    %361 = vmatpush2.msra.mxu0 0.0
    %362 = vmatprep.subr.mxu0 0.0
    %363 = vmatpush2.msra.mxu0 0.0
    %364 = vmatprep.subr.mxu0 0.0
    %365 = vmatpush2.msra.mxu0 0.0
    %366 = vmatprep.subr.mxu0 0.0
    %367 = vmatpush2.msra.mxu0 0.0
    %368 = vmatprep.subr.mxu0 0.0
    %369 = vmatpush2.msra.mxu0 0.0
    %370 = vmatprep.subr.mxu0 0.0
    %371 = vmatpush2.msra.mxu0 0.0
    %372 = vmatprep.subr.mxu0 0.0
    %373 = vmatpush2.msra.mxu0 0.0
    %374 = vmatprep.subr.mxu0 0.0
    %375 = vmatpush2.msra.mxu0 0.0
    %376 = vmatprep.subr.mxu0 0.0
    %377 = vmatpush2.msra.mxu0 0.0
    %378 = vmatprep.subr.mxu0 0.0
    %379 = vmatpush2.msra.mxu0 0.0
    %380 = vmatprep.subr.mxu0 0.0
    %381 = vmatpush2.msra.mxu0 0.0
    %382 = vmatprep.subr.mxu0 0.0
    %383 = vmatpush2.msra.mxu0 0.0
    %384 = vmatprep.subr.mxu0 0.0
    %385 = vmatpush2.msra.mxu0 0.0
    %386 = vmatprep.mubr.f32.mxu0 0.0
    %387 = vmatmul.mubr.f32.gmra.mxu0 %v320
    %v388 = vpop.f32.mrf.mxu0
    %v389 = vadd.f32 0.0, %v388
    %v390 = vpop.f32.mrf.mxu0
    %391 = vdwg.mxu0
    %v392 = vmul.f32 %v157, %v389
    %393 = vmatprep.subr.mxu0 0.0
    %394 = vmatpush1.msra.mxu0 0.0
    %395 = vmatprep.subr.mxu0 0.0
    %396 = vmatpush1.msra.mxu0 0.0
    %397 = vmatprep.subr.mxu0 0.0
    %398 = vmatpush1.msra.mxu0 0.0
    %399 = vmatprep.subr.mxu0 0.0
    %400 = vmatpush1.msra.mxu0 0.0
    %401 = vmatprep.subr.mxu0 0.0
    %402 = vmatpush1.msra.mxu0 0.0
    %403 = vmatprep.subr.mxu0 0.0
    %404 = vmatpush1.msra.mxu0 0.0
    %405 = vmatprep.subr.mxu0 0.0
    %406 = vmatpush1.msra.mxu0 0.0
    %407 = vmatprep.subr.mxu0 0.0
    %408 = vmatpush1.msra.mxu0 0.0
    %409 = vmatprep.subr.mxu0 0.0
    %410 = vmatpush1.msra.mxu0 0.0
    %411 = vmatprep.subr.mxu0 0.0
    %412 = vmatpush1.msra.mxu0 0.0
    %413 = vmatprep.subr.mxu0 0.0
    %414 = vmatpush1.msra.mxu0 0.0
    %415 = vmatprep.subr.mxu0 0.0
    %416 = vmatpush1.msra.mxu0 0.0
    %417 = vmatprep.subr.mxu0 0.0
    %418 = vmatpush1.msra.mxu0 0.0
    %419 = vmatprep.subr.mxu0 0.0
    %420 = vmatpush1.msra.mxu0 0.0
    %421 = vmatprep.subr.mxu0 0.0
    %422 = vmatpush1.msra.mxu0 0.0
    %423 = vmatprep.subr.mxu0 0.0
    %424 = vmatpush1.msra.mxu0 %v392
    %425 = vmatprep.subr.mxu0 0.0
    %426 = vmatpush2.msra.mxu0 0.0
    %427 = vmatprep.subr.mxu0 0.0
    %428 = vmatpush2.msra.mxu0 0.0
    %429 = vmatprep.subr.mxu0 0.0
    %430 = vmatpush2.msra.mxu0 0.0
    %431 = vmatprep.subr.mxu0 0.0
    %432 = vmatpush2.msra.mxu0 0.0
    %433 = vmatprep.subr.mxu0 0.0
    %434 = vmatpush2.msra.mxu0 0.0
    %435 = vmatprep.subr.mxu0 0.0
    %436 = vmatpush2.msra.mxu0 0.0
    %437 = vmatprep.subr.mxu0 0.0
    %438 = vmatpush2.msra.mxu0 0.0
    %439 = vmatprep.subr.mxu0 0.0
    %440 = vmatpush2.msra.mxu0 0.0
    %441 = vmatprep.subr.mxu0 0.0
    %442 = vmatpush2.msra.mxu0 0.0
    %443 = vmatprep.subr.mxu0 0.0
    %444 = vmatpush2.msra.mxu0 0.0
    %445 = vmatprep.subr.mxu0 0.0
    %446 = vmatpush2.msra.mxu0 0.0
    %447 = vmatprep.subr.mxu0 0.0
    %448 = vmatpush2.msra.mxu0 0.0
    %449 = vmatprep.subr.mxu0 0.0
    %450 = vmatpush2.msra.mxu0 0.0
    %451 = vmatprep.subr.mxu0 0.0
    %452 = vmatpush2.msra.mxu0 0.0
    %453 = vmatprep.subr.mxu0 0.0
    %454 = vmatpush2.msra.mxu0 0.0
    %455 = vmatprep.subr.mxu0 0.0
    %456 = vmatpush2.msra.mxu0 0.0
    %457 = vmatprep.mubr.f32.mxu0 0.0
    %458 = vmatmul.mubr.f32.gmra.mxu0 %v240
    %v459 = vpop.f32.mrf.mxu0
    %v460 = vadd.f32 0.0, %v459
    %v461 = vpop.f32.mrf.mxu0
    %462 = vdwg.mxu0
    %v463 = vmul.f32 %v157, %v460
    %v464 = vlaneseq
    %v465 = vshrl.u32 %v464, 7
    %v466 = vsub.s32 0, %v465
    %v467 = vrot.slane %v162, %v466
    %v468 = vadd.f32 %v463, %v467
    %vm469 = vcmp.lt.s32.totalorder %v71, 7
    %v470 = vsel %vm469, %v468, -1e+30
    %v471 = vsel %vm164, %v470, -inf
    %472 = vmax.xlane.f32.xlu0 %v471
    %v473 = vpop.xlane.xlu0 %472
    %v474 = vsub.f32 %v470, %v473
    %v475 = vmul.f32 %v474, 1.442695
    %v476 = vpow.pop %v475
    %v477 = vsel %vm164, %v476, 0.0
    %478 = vadd.xlane.f32.xlu0 %v477
    %v479 = vpop.xlane.xlu0 %478
    %v480 = vlog2.pop %v479
    %v481 = vmul.f32 %v480, 0.6931472
    %v482 = vsub.f32 %v474, %v481
    %483 = vst.msk [vmem:[#allocation8] sm:$0xff] %vm164, %v482
    // Predicated region
    $region26: #{gcn_forward.1} parent=1 // pred_check
      _
    $region27: #{gcn_forward.1} parent=1 // pred_check_branch
      %485 = sbr.rel (0) target = $region29
    $region28: #{gcn_forward.1} parent=1 // pred_region
      %s487 = ssub.s32 128, 128
      %488 = vsyncadd [#allocation4], %s487
      %s490 = sshll.u32 [#allocation8], 4
      %s491 = int_to_ptr.vmem [resolvable:$true] %s490
      %493 = dma.vmem_to_hbm [thread:$0]  %s491, 128, %s3, [#allocation4]
    $region29: #{gcn_forward.1} parent=1 // pred_fallthru
      _
    // Predicated region
    $region30: #{gcn_forward.1} parent=1 // pred_check
      _
    $region31: #{gcn_forward.1} parent=1 // pred_check_branch
      %495 = sbr.rel (0) target = $region33
    $region32: #{gcn_forward.1} parent=1 // pred_region
      %496 = dma.done [#allocation4], 128
    $region33: #{gcn_forward.1} parent=1 // pred_fallthru
      _
    %497 = vsyncpa [#allocation3], 1
    %498 = vsyncpa [#allocation6], 1
    %499 = vsyncpa [#allocation4], 1

</llo_original>
